<compile_context>
chip_gen: v6e
topology: v6e:2x2x1
jax: 0.10.0
libtpu: 0.0.40
codegen_flags: <defaults>
</compile_context>

<pallas_src>
import functools

import jax
import jax.numpy as jnp
from jax.experimental import pallas as pl
from jax.experimental.pallas import tpu as pltpu


def _round_up(x, m):
    return ((x + m - 1) // m) * m


_NEG_BIG = -1e30  # finite "minus infinity" so 0 * pad never produces NaN


# --------------------------------------------------------------------------
# Cross entropy with label smoothing: streaming over class tiles.
# --------------------------------------------------------------------------
def _ce_kernel(target_ref, score_ref, ce_ref, m_ref, l_ref, w_ref,
               *, num_class, epsilon, c_tile):
    k = pl.program_id(1)
    nc = pl.num_programs(1)

    @pl.when(k == 0)
    def _():
        m_ref[...] = jnp.full_like(m_ref, _NEG_BIG)
        l_ref[...] = jnp.zeros_like(l_ref)
        w_ref[...] = jnp.zeros_like(w_ref)

    score = score_ref[...].astype(jnp.float32)                 # (Bt, Ct)
    bt, ct = score.shape
    tgt = target_ref[...]                                      # (Bt, 1) int32

    # Global class ids for this tile; mask out lane padding (>= num_class).
    class_ids = k * c_tile + jax.lax.broadcasted_iota(jnp.int32, (bt, ct), 1)
    valid = class_ids < num_class
    validf = valid.astype(jnp.float32)
    one_hot = jnp.logical_and(class_ids == tgt, valid).astype(jnp.float32)
    smooth = (1.0 - epsilon) * one_hot + (epsilon / float(num_class)) * validf

    score_m = jnp.where(valid, score, _NEG_BIG)

    # Online logsumexp update.
    m_prev = m_ref[...]
    m_new = jnp.maximum(m_prev, jnp.max(score_m, axis=1, keepdims=True))
    l_ref[...] = l_ref[...] * jnp.exp(m_prev - m_new) + jnp.sum(
        jnp.where(valid, jnp.exp(score - m_new), 0.0), axis=1, keepdims=True)
    m_ref[...] = m_new

    # Running  sum_c smooth[i,c] * score[i,c]  (no rescaling needed).
    w_ref[...] += jnp.sum(smooth * jnp.where(valid, score, 0.0),
                          axis=1, keepdims=True)

    @pl.when(k == nc - 1)
    def _():
        # sum_c smooth = 1 exactly, so  ce_i = LSE_i - sum_c smooth*score.
        ce_ref[...] = m_ref[...] + jnp.log(l_ref[...]) - w_ref[...]


# --------------------------------------------------------------------------
# Hard-mining triplet loss: single invocation, MXU gram without transpose.
# --------------------------------------------------------------------------
def _triplet_kernel(tgt_col_ref, tgt_row_ref, feat_ref, out_ref, *, batch, margin):
    feat = feat_ref[...].astype(jnp.float32)                   # (Bp, Dp), zero-padded
    bp = feat.shape[0]

    # MXU: contract last dims of both operands directly (no .T / XLU transpose).
    gram = jax.lax.dot_general(feat, feat, (((1,), (1,)), ((), ())),
                               preferred_element_type=jnp.float32)  # (Bp, Bp)

    sq_col = jnp.sum(feat * feat, axis=1, keepdims=True)       # (Bp, 1)
    row_ids = jax.lax.broadcasted_iota(jnp.int32, (bp, bp), 0)
    col_ids = jax.lax.broadcasted_iota(jnp.int32, (bp, bp), 1)
    eye = row_ids == col_ids
    # (1, Bp) row norms straight from the gram diagonal (no sq.T transpose).
    sq_row = jnp.sum(jnp.where(eye, gram, 0.0), axis=0, keepdims=True)

    dist2 = sq_col + sq_row - 2.0 * gram
    dist = jnp.sqrt(jnp.clip(dist2, 1e-12, None))              # (Bp, Bp)

    tgt_col = tgt_col_ref[...]                                  # (Bp, 1)
    tgt_row = tgt_row_ref[...]                                  # (1, Bp)
    same_id = tgt_col == tgt_row                                # (Bp, Bp)
    valid_col = col_ids < batch
    valid_row = jax.lax.broadcasted_iota(jnp.int32, (bp, 1), 0) < batch

    neg_inf = jnp.float32(-jnp.inf)
    pos_inf = jnp.float32(jnp.inf)
    ap = jnp.max(jnp.where(jnp.logical_and(same_id, valid_col), dist, neg_inf),
                 axis=1, keepdims=True)                         # (Bp, 1)
    an = jnp.min(jnp.where(jnp.logical_and(jnp.logical_not(same_id), valid_col),
                           dist, pos_inf),
                 axis=1, keepdims=True)                         # (Bp, 1)
    tri = jnp.maximum(ap - an + margin, 0.0)
    out_ref[0, 0] = jnp.sum(jnp.where(valid_row, tri, 0.0)) / float(batch)


# --------------------------------------------------------------------------
# Wrapper
# --------------------------------------------------------------------------
def softmax_triplet_loss(score, feat, target, *, num_class, margin=0.3, epsilon=0.1):
    """score: (B, num_class) f32, feat: (B, D) f32, target: (B,) int labels."""
    B, C = score.shape
    D = feat.shape[1]

    # Tile / padding choices (lane-dense, sized well under 32 MiB scoped VMEM).
    B_TILE = min(_round_up(B, 8), 256)
    B_pad = _round_up(B, B_TILE)
    C_TILE = min(_round_up(C, 128), 2048)
    C_pad = _round_up(C, C_TILE)
    D_pad = _round_up(D, 128)

    score_p = jnp.full((B_pad, C_pad), _NEG_BIG, jnp.float32)
    score_p = score_p.at[:B, :C].set(score.astype(jnp.float32))
    feat_p = jnp.zeros((B_pad, D_pad), jnp.float32)
    feat_p = feat_p.at[:B, :D].set(feat.astype(jnp.float32))

    tgt = target.astype(jnp.int32)
    tgt_col = jnp.full((B_pad, 1), -1, jnp.int32).at[:B, 0].set(tgt)   # (B_pad, 1)
    tgt_row = tgt_col.reshape(1, B_pad)                                # (1, B_pad)

    nb = B_pad // B_TILE
    nc = C_pad // C_TILE

    vmem_limit = 32 * 1024 * 1024  # v7x-safe scoped budget; tiles fit with headroom

    # ---- CE: streaming over class tiles, per-row CE written on last C step ----
    ce_rows = pl.pallas_call(
        functools.partial(_ce_kernel, num_class=num_class,
                          epsilon=float(epsilon), c_tile=C_TILE),
        out_shape=jax.ShapeDtypeStruct((B_pad, 1), jnp.float32),
        grid_spec=pltpu.PrefetchScalarGridSpec(
            num_scalar_prefetch=0,
            grid=(nb, nc),
            in_specs=[
                pl.BlockSpec((B_TILE, 1), lambda i, k: (i, 0)),        # target
                pl.BlockSpec((B_TILE, C_TILE), lambda i, k: (i, k)),   # score tile
            ],
            out_specs=pl.BlockSpec((B_TILE, 1), lambda i, k: (i, 0)),
            scratch_shapes=[pltpu.VMEM((B_TILE, 1), jnp.float32),      # running max
                            pltpu.VMEM((B_TILE, 1), jnp.float32),      # running sum-exp
                            pltpu.VMEM((B_TILE, 1), jnp.float32)],     # running smooth.score
        ),
        compiler_params=pltpu.CompilerParams(
            dimension_semantics=("parallel", "arbitrary"),
            vmem_limit_bytes=vmem_limit),
    )(tgt_col, score_p)
    ce_loss = jnp.sum(ce_rows[:B, 0]) / float(B)

    # ---- Triplet: computed exactly once ----
    # TODO(synk): for very large B, stripe the (B,B) dist matrix row-wise instead of
    # materializing it whole.
    tri = pl.pallas_call(
        functools.partial(_triplet_kernel, batch=B, margin=float(margin)),
        out_shape=jax.ShapeDtypeStruct((1, 1), jnp.float32),
        grid_spec=pltpu.PrefetchScalarGridSpec(
            num_scalar_prefetch=0,
            grid=(1,),
            in_specs=[
                pl.BlockSpec((B_pad, 1), lambda i: (0, 0)),     # target, column layout
                pl.BlockSpec((1, B_pad), lambda i: (0, 0)),     # target, row (lane) layout
                pl.BlockSpec((B_pad, D_pad), lambda i: (0, 0)), # feat (zero-padded)
            ],
            out_specs=pl.BlockSpec(memory_space=pltpu.MemorySpace.SMEM),
        ),
        compiler_params=pltpu.CompilerParams(
            dimension_semantics=("arbitrary",),
            vmem_limit_bytes=vmem_limit),
    )(tgt_col, tgt_row, feat_p)

    return ce_loss + tri[0, 0]


# --------------------------------------------------------------------------
# Pure-JAX reference
# --------------------------------------------------------------------------
def _reference(score, feat, target, num_class, margin, epsilon):
    log_probs = jax.nn.log_softmax(score, axis=1)
    one_hot = jax.nn.one_hot(target, num_class, dtype=jnp.float32)
    smooth = (1.0 - epsilon) * one_hot + epsilon / num_class
    ce = jnp.sum(-smooth * log_probs) / score.shape[0]

    sq = jnp.sum(feat * feat, axis=1, keepdims=True)
    dist = jnp.sqrt(jnp.clip(sq + sq.T - 2.0 * feat @ feat.T, 1e-12, None))
    mask = target[:, None] == target[None, :]
    ap = jnp.max(jnp.where(mask, dist, -jnp.inf), axis=1)
    an = jnp.min(jnp.where(mask, jnp.inf, dist), axis=1)
    tri = jnp.mean(jnp.maximum(ap - an + margin, 0.0))
    return ce + tri


if __name__ == "__main__":
    # Deterministic synthetic inputs (no checkpoint load).
    B, NUM_CLASS, D = 8, 16, 32
    MARGIN, EPSILON = 0.3, 0.1

    key = jax.random.PRNGKey(0)
    k1, k2 = jax.random.split(key)
    score = jax.random.normal(k1, (B, NUM_CLASS), dtype=jnp.float32)
    feat = jax.random.normal(k2, (B, D), dtype=jnp.float32)
    # 2 identities x 4 instances (targets also serve as class labels < NUM_CLASS)
    target = jnp.array([0, 0, 0, 0, 1, 1, 1, 1], dtype=jnp.int32)

    loss = softmax_triplet_loss(score, feat, target,
                                num_class=NUM_CLASS, margin=MARGIN, epsilon=EPSILON)
    loss = jax.block_until_ready(loss)

    ref = _reference(score, feat, target, NUM_CLASS, MARGIN, EPSILON)
    assert jnp.allclose(loss, ref, rtol=1e-4, atol=1e-4), (loss, ref)

    print("KERNEL_OK")
</pallas_src>

<mosaic_0001>
module attributes {stable_mosaic.version = 11 : i64} {
  func.func @_ce_kernel(%arg0: i32, %arg1: i32, %arg2: memref<8x1xi32, #tpu.memory_space<vmem>>, %arg3: memref<8x128xf32, #tpu.memory_space<vmem>>, %arg4: memref<8x1xf32, #tpu.memory_space<vmem>>, %arg5: memref<8x1xf32, #tpu.memory_space<vmem>>, %arg6: memref<8x1xf32, #tpu.memory_space<vmem>>, %arg7: memref<8x1xf32, #tpu.memory_space<vmem>>) attributes {dimension_semantics = [#tpu.dimension_semantics<parallel>, #tpu.dimension_semantics<arbitrary>], iteration_bounds = array<i64: 1, 1>, scalar_prefetch = 0 : i64, scratch_operands = 3 : i64, tpu.core_type = #tpu.core_type<tc>, window_params = [{transform_indices = @transform_0, window_bounds = array<i64: 8, 1>}, {transform_indices = @transform_1, window_bounds = array<i64: 8, 128>}, {transform_indices = @transform_2, window_bounds = array<i64: 8, 1>}]} {
    %c0_i32 = arith.constant 0 : i32
    %0 = arith.cmpi eq, %arg1, %c0_i32 : i32
    %1 = arith.extui %0 : i1 to i32
    %c0_i32_0 = arith.constant 0 : i32
    %2 = arith.cmpi ne, %1, %c0_i32_0 : i32
    scf.if %2 {
      %cst_25 = arith.constant -1.000000e+30 : f32
      %54 = vector.broadcast %cst_25 : f32 to vector<8x1xf32>
      %c0_26 = arith.constant 0 : index
      %c0_27 = arith.constant 0 : index
      %55 = vector.load %arg5[%c0_26, %c0_27] : memref<8x1xf32, #tpu.memory_space<vmem>>, vector<8x1xf32>
      tpu.vector_store %arg5[%c0_26, %c0_27], %54 {strides = array<i32>} : memref<8x1xf32, #tpu.memory_space<vmem>>, vector<8x1xf32>,
      %cst_28 = arith.constant 0.000000e+00 : f32
      %56 = vector.broadcast %cst_28 : f32 to vector<8x1xf32>
      %c0_29 = arith.constant 0 : index
      %c0_30 = arith.constant 0 : index
      %57 = vector.load %arg6[%c0_29, %c0_30] : memref<8x1xf32, #tpu.memory_space<vmem>>, vector<8x1xf32>
      tpu.vector_store %arg6[%c0_29, %c0_30], %56 {strides = array<i32>} : memref<8x1xf32, #tpu.memory_space<vmem>>, vector<8x1xf32>,
      %cst_31 = arith.constant 0.000000e+00 : f32
      %58 = vector.broadcast %cst_31 : f32 to vector<8x1xf32>
      %c0_32 = arith.constant 0 : index
      %c0_33 = arith.constant 0 : index
      %59 = vector.load %arg7[%c0_32, %c0_33] : memref<8x1xf32, #tpu.memory_space<vmem>>, vector<8x1xf32>
      tpu.vector_store %arg7[%c0_32, %c0_33], %58 {strides = array<i32>} : memref<8x1xf32, #tpu.memory_space<vmem>>, vector<8x1xf32>,
    } else {
    }
    %c0 = arith.constant 0 : index
    %c0_1 = arith.constant 0 : index
    %3 = vector.load %arg3[%c0, %c0_1] : memref<8x128xf32, #tpu.memory_space<vmem>>, vector<8x128xf32>
    %c0_2 = arith.constant 0 : index
    %c0_3 = arith.constant 0 : index
    %4 = vector.load %arg2[%c0_2, %c0_3] : memref<8x1xi32, #tpu.memory_space<vmem>>, vector<8x1xi32>
    %c128_i32 = arith.constant 128 : i32
    %5 = arith.muli %arg1, %c128_i32 : i32
    %6 = tpu.iota {dimensions = array<i32: 1>} : vector<8x128xi32>
    %7 = vector.broadcast %5 : i32 to vector<8x128xi32>
    %8 = arith.addi %7, %6 : vector<8x128xi32>
    %c16_i32 = arith.constant 16 : i32
    %9 = vector.broadcast %c16_i32 : i32 to vector<8x128xi32>
    %10 = arith.cmpi slt, %8, %9 : vector<8x128xi32>
    %11 = arith.extui %10 : vector<8x128xi1> to vector<8x128xi32>
    %12 = arith.sitofp %11 : vector<8x128xi32> to vector<8x128xf32>
    %13 = vector.broadcast %4 : vector<8x1xi32> to vector<8x128xi32>
    %14 = arith.cmpi eq, %8, %13 : vector<8x128xi32>
    %15 = arith.andi %14, %10 : vector<8x128xi1>
    %16 = arith.extui %15 : vector<8x128xi1> to vector<8x128xi32>
    %17 = arith.sitofp %16 : vector<8x128xi32> to vector<8x128xf32>
    %cst = arith.constant 0.899999976 : f32
    %18 = vector.broadcast %cst : f32 to vector<8x128xf32>
    %19 = arith.mulf %18, %17 : vector<8x128xf32>
    %cst_4 = arith.constant 6.250000e-03 : f32
    %20 = vector.broadcast %cst_4 : f32 to vector<8x128xf32>
    %21 = arith.mulf %20, %12 : vector<8x128xf32>
    %22 = arith.addf %19, %21 : vector<8x128xf32>
    %cst_5 = arith.constant -1.000000e+30 : f32
    %23 = vector.broadcast %cst_5 : f32 to vector<8x128xf32>
    %24 = arith.select %10, %3, %23 : vector<8x128xi1>, vector<8x128xf32>
    %c0_6 = arith.constant 0 : index
    %c0_7 = arith.constant 0 : index
    %25 = vector.load %arg5[%c0_6, %c0_7] : memref<8x1xf32, #tpu.memory_space<vmem>>, vector<8x1xf32>
    %cst_8 = arith.constant dense<0xFF800000> : vector<8xf32>
    %26 = vector.multi_reduction <maximumf>, %24, %cst_8 [1] : vector<8x128xf32> to vector<8xf32>
    %27 = vector.shape_cast %26 : vector<8xf32> to vector<8x1xf32>
    %28 = arith.maximumf %25, %27 : vector<8x1xf32>
    %c0_9 = arith.constant 0 : index
    %c0_10 = arith.constant 0 : index
    %29 = vector.load %arg6[%c0_9, %c0_10] : memref<8x1xf32, #tpu.memory_space<vmem>>, vector<8x1xf32>
    %30 = arith.subf %25, %28 : vector<8x1xf32>
    %31 = math.exp %30 : vector<8x1xf32>
    %32 = arith.mulf %29, %31 : vector<8x1xf32>
    %33 = vector.broadcast %28 : vector<8x1xf32> to vector<8x128xf32>
    %34 = arith.subf %3, %33 : vector<8x128xf32>
    %35 = math.exp %34 : vector<8x128xf32>
    %cst_11 = arith.constant 0.000000e+00 : f32
    %36 = vector.broadcast %cst_11 : f32 to vector<8x128xf32>
    %37 = arith.select %10, %35, %36 : vector<8x128xi1>, vector<8x128xf32>
    %cst_12 = arith.constant dense<0.000000e+00> : vector<8xf32>
    %38 = vector.multi_reduction <add>, %37, %cst_12 [1] : vector<8x128xf32> to vector<8xf32>
    %39 = vector.shape_cast %38 : vector<8xf32> to vector<8x1xf32>
    %40 = arith.addf %32, %39 : vector<8x1xf32>
    %c0_13 = arith.constant 0 : index
    %c0_14 = arith.constant 0 : index
    %41 = vector.load %arg6[%c0_13, %c0_14] : memref<8x1xf32, #tpu.memory_space<vmem>>, vector<8x1xf32>
    tpu.vector_store %arg6[%c0_13, %c0_14], %40 {strides = array<i32>} : memref<8x1xf32, #tpu.memory_space<vmem>>, vector<8x1xf32>,
    %c0_15 = arith.constant 0 : index
    %c0_16 = arith.constant 0 : index
    %42 = vector.load %arg5[%c0_15, %c0_16] : memref<8x1xf32, #tpu.memory_space<vmem>>, vector<8x1xf32>
    tpu.vector_store %arg5[%c0_15, %c0_16], %28 {strides = array<i32>} : memref<8x1xf32, #tpu.memory_space<vmem>>, vector<8x1xf32>,
    %c0_17 = arith.constant 0 : index
    %c0_18 = arith.constant 0 : index
    %43 = vector.load %arg7[%c0_17, %c0_18] : memref<8x1xf32, #tpu.memory_space<vmem>>, vector<8x1xf32>
    %cst_19 = arith.constant 0.000000e+00 : f32
    %44 = vector.broadcast %cst_19 : f32 to vector<8x128xf32>
    %45 = arith.select %10, %3, %44 : vector<8x128xi1>, vector<8x128xf32>
    %46 = arith.mulf %22, %45 : vector<8x128xf32>
    %cst_20 = arith.constant dense<0.000000e+00> : vector<8xf32>
    %47 = vector.multi_reduction <add>, %46, %cst_20 [1] : vector<8x128xf32> to vector<8xf32>
    %48 = vector.shape_cast %47 : vector<8xf32> to vector<8x1xf32>
    %49 = arith.addf %43, %48 : vector<8x1xf32>
    %c0_21 = arith.constant 0 : index
    %c0_22 = arith.constant 0 : index
    %50 = vector.load %arg7[%c0_21, %c0_22] : memref<8x1xf32, #tpu.memory_space<vmem>>, vector<8x1xf32>
    tpu.vector_store %arg7[%c0_21, %c0_22], %49 {strides = array<i32>} : memref<8x1xf32, #tpu.memory_space<vmem>>, vector<8x1xf32>,
    %c0_i32_23 = arith.constant 0 : i32
    %51 = arith.cmpi eq, %arg1, %c0_i32_23 : i32
    %52 = arith.extui %51 : i1 to i32
    %c0_i32_24 = arith.constant 0 : i32
    %53 = arith.cmpi ne, %52, %c0_i32_24 : i32
    scf.if %53 {
      %c0_25 = arith.constant 0 : index
      %c0_26 = arith.constant 0 : index
      %54 = vector.load %arg5[%c0_25, %c0_26] : memref<8x1xf32, #tpu.memory_space<vmem>>, vector<8x1xf32>
      %c0_27 = arith.constant 0 : index
      %c0_28 = arith.constant 0 : index
      %55 = vector.load %arg6[%c0_27, %c0_28] : memref<8x1xf32, #tpu.memory_space<vmem>>, vector<8x1xf32>
      %56 = math.log %55 : vector<8x1xf32>
      %57 = arith.addf %54, %56 : vector<8x1xf32>
      %c0_29 = arith.constant 0 : index
      %c0_30 = arith.constant 0 : index
      %58 = vector.load %arg7[%c0_29, %c0_30] : memref<8x1xf32, #tpu.memory_space<vmem>>, vector<8x1xf32>
      %59 = arith.subf %57, %58 : vector<8x1xf32>
      %c0_31 = arith.constant 0 : index
      %c0_32 = arith.constant 0 : index
      %60 = vector.load %arg4[%c0_31, %c0_32] : memref<8x1xf32, #tpu.memory_space<vmem>>, vector<8x1xf32>
      tpu.vector_store %arg4[%c0_31, %c0_32], %59 {strides = array<i32>} : memref<8x1xf32, #tpu.memory_space<vmem>>, vector<8x1xf32>,
    } else {
    }
    return
  }
  func.func @transform_0(%arg0: i32, %arg1: i32) -> (i32, i32) {
    %c0_i32 = arith.constant 0 : i32
    %c0_i32_0 = arith.constant 0 : i32
    return %arg0, %c0_i32 : i32, i32
  }
  func.func @transform_1(%arg0: i32, %arg1: i32) -> (i32, i32) {
    %c0_i32 = arith.constant 0 : i32
    return %arg0, %arg1 : i32, i32
  }
  func.func @transform_2(%arg0: i32, %arg1: i32) -> (i32, i32) {
    %c0_i32 = arith.constant 0 : i32
    %c0_i32_0 = arith.constant 0 : i32
    return %arg0, %c0_i32 : i32, i32
  }
}

</mosaic_0001>

<llo_original>
// kernel: tpu_custom_call.1
$region0: #{tpu_custom_call.1}
  #allocation0 [shape = 'u32[]', space=smem, size = 0x4, offset = 0x4, fixed_abs, tag = 'smem constant byte address 0x4 - core index']
  #allocation1 [shape = 'u32[144,128]{1,0:T(1,128)}', space=vmem, size = 0x12000, scoped, tag = 'internal scratch']
  #allocation2 [shape = 'f32[8,1]{1,0:T(8,128)}', space=vmem, size = 0x1000, scoped, tag = 'scratch operand']
  #allocation3 [shape = 'f32[8,1]{1,0:T(8,128)}', space=vmem, size = 0x1000, scoped, tag = 'scratch operand']
  #allocation4 [shape = 'f32[8,1]{1,0:T(8,128)}', space=vmem, size = 0x1000, scoped, tag = 'scratch operand']
  %s0 = inlined_call_operand.vmem [shape: s32[8,1], index: 0, kind: input, shape index: {}]
  %s1 = inlined_call_operand.vmem [shape: f32[8,128], index: 1, kind: input, shape index: {}]
  %s2 = inlined_call_operand.vmem [shape: f32[8,1], index: 2, kind: output, shape index: {}]
  %s3 = sld [smem:[#allocation0]]
  $region26: #{tpu_custom_call.1} parent=0
    _
  %s5 = ssub.s32 1, %s3
  %s6 = scalar_select 0, %s5, %s3
  // Predicated region
  $region2: #{tpu_custom_call.1} parent=0 // pred_check
    _
  $region3: #{tpu_custom_call.1} parent=0 // pred_check_branch
    %8 = sbr.rel (0) target = $region5
  $region4: #{tpu_custom_call.1} parent=0 // pred_region
    _
  $region5: #{tpu_custom_call.1} parent=0 // pred_fallthru
    _
  // Predicated region
  $region6: #{tpu_custom_call.1} parent=0 // pred_check
    _
  $region7: #{tpu_custom_call.1} parent=0 // pred_check_branch
    %10 = sbr.rel (0) target = $region9
  $region8: #{tpu_custom_call.1} parent=0 // pred_region
    _
  $region9: #{tpu_custom_call.1} parent=0 // pred_fallthru
    _
  %p11 = scmp.eq.s32.totalorder 0, 0
  // Predicated region
  $region10: #{tpu_custom_call.1} parent=0 // pred_check
    %p12 = pneg %p11
  $region11: #{tpu_custom_call.1} parent=0 // pred_check_branch
    %14 = sbr.rel (%p12) target = $region13
  $region12: #{tpu_custom_call.1} parent=0 // pred_region
    %vm15 = vcmask 7168
    %16 = vst.msk [vmem:[#allocation2] sm:$0xff] %vm15, -1e+30
    %17 = vst.msk [vmem:[#allocation3] sm:$0xff] %vm15, 0.0
    %18 = vst.msk [vmem:[#allocation4] sm:$0xff] %vm15, 0.0
  $region13: #{tpu_custom_call.1} parent=0 // pred_fallthru
    _
  %v19 = vld [vmem:[%s1] sm:$0xff]
  %v20 = vld [vmem:[%s0] sm:$0xff]
  %s21 = smul.u32 0, 128
  %v22 = vlaneseq
  %v23 = vand.u32 %v22, 127
  %v24 = vstv %s21
  %v25 = vadd.s32 %v24, %v23
  %vm26 = vcmp.lt.s32.totalorder %v25, 16
  %v27 = vsel %vm26, 1, 0
  %v28 = vcvt.s32.f32 %v27
  %29 = vset.pattern.permute.xlu0 0
  %30 = vperm.xlu0 %29, %v20
  %v31 = vpop.permute.xlu0 %30
  %vm32 = vcmp.eq.s32.totalorder %v25, %v31
  %vm33 = vmand %vm32, %vm26
  %v34 = vsel %vm33, 1, 0
  %v35 = vcvt.s32.f32 %v34
  %v36 = vmul.f32 %v35, 0.9
  %v37 = vmul.f32 %v28, 0.00625
  %v38 = vadd.f32 %v36, %v37
  %v39 = vsel %vm26, %v19, -1e+30
  %v40 = vld [vmem:[#allocation2] sm:$0xff]
  %41 = vmax.xlane.f32.xlu0 %v39
  %v42 = vpop.xlane.xlu0 %41
  %v43 = vmax.f32 %v40, %v42
  %v44 = vld [vmem:[#allocation3] sm:$0xff]
  %v45 = vsub.f32 %v40, %v43
  %v46 = vmul.f32 %v45, 1.442695
  %v47 = vpow.pop %v46
  %v48 = vmul.f32 %v44, %v47
  %50 = vset.pattern.permute.xlu0 0
  %51 = vperm.xlu0 %50, %v43
  %v52 = vpop.permute.xlu0 %51
  %v54 = vsub.f32 %v19, %v52
  %v55 = vmul.f32 %v54, 1.442695
  %v56 = vpow.pop %v55
  %v57 = vsel %vm26, %v56, 0.0
  %58 = vadd.xlane.f32.xlu0 %v57
  %v59 = vpop.xlane.xlu0 %58
  %v60 = vadd.f32 %v48, %v59
  %vm61 = vcmask 7168
  %62 = vst.msk [vmem:[#allocation3] sm:$0xff] %vm61, %v60
  %63 = vst.msk [vmem:[#allocation2] sm:$0xff] %vm61, %v43
  %v64 = vld [vmem:[#allocation4] sm:$0xff]
  %v65 = vsel %vm26, %v19, 0.0
  %v66 = vmul.f32 %v38, %v65
  %67 = vadd.xlane.f32.xlu0 %v66
  %v68 = vpop.xlane.xlu0 %67
  %v69 = vadd.f32 %v64, %v68
  %70 = vst.msk [vmem:[#allocation4] sm:$0xff] %vm61, %v69
  // Predicated region
  $region14: #{tpu_custom_call.1} parent=0 // pred_check
    %p71 = pneg %p11
  $region15: #{tpu_custom_call.1} parent=0 // pred_check_branch
    %73 = sbr.rel (%p71) target = $region17
  $region16: #{tpu_custom_call.1} parent=0 // pred_region
    %v74 = vld [vmem:[#allocation2] sm:$0xff]
    %v75 = vld [vmem:[#allocation3] sm:$0xff]
    %v76 = vlog2.pop %v75
    %v77 = vmul.f32 %v76, 0.6931472
    %v78 = vadd.f32 %v74, %v77
    %v79 = vld [vmem:[#allocation4] sm:$0xff]
    %v80 = vsub.f32 %v78, %v79
    %81 = vst.msk [vmem:[%s2] sm:$0xff] %vm61, %v80
  $region17: #{tpu_custom_call.1} parent=0 // pred_fallthru
    _
  // Predicated region
  $region18: #{tpu_custom_call.1} parent=0 // pred_check
    _
  $region19: #{tpu_custom_call.1} parent=0 // pred_check_branch
    %83 = sbr.rel (0) target = $region21
  $region20: #{tpu_custom_call.1} parent=0 // pred_region
    _
  $region21: #{tpu_custom_call.1} parent=0 // pred_fallthru
    _
  // Predicated region
  $region22: #{tpu_custom_call.1} parent=0 // pred_check
    _
  $region23: #{tpu_custom_call.1} parent=0 // pred_check_branch
    %85 = sbr.rel (0) target = $region25
  $region24: #{tpu_custom_call.1} parent=0 // pred_region
    _
  $region25: #{tpu_custom_call.1} parent=0 // pred_fallthru
    _

</llo_original>
